<compile_context>
chip_gen: v7x
topology: tpu7x:2x2x1
jax: 0.10.0
libtpu: 0.0.40
codegen_flags: <defaults>
</compile_context>

<pallas_src>
import math

import jax
import jax.numpy as jnp
from jax import lax
from jax.experimental import pallas as pl
from jax.experimental.pallas import tpu as pltpu


TM_MAX = 1024                 # max row tile for linear / GLU kernels
MM_DTYPE = jnp.bfloat16       # matmul operand dtype (f32 accumulation)
VMEM_LIMIT_BYTES = 48 * 1024 * 1024   # fits v7x 64 MiB with headroom
SSM_VMEM_BUDGET = 40 * 1024 * 1024    # working-set target for SSM chunk sizing


def _sigmoid(x):
    # exact sigmoid via tanh (EUP); avoids exp overflow for very negative x
    return 0.5 * (jnp.tanh(0.5 * x) + 1.0)


def _erf(z):
    # Abramowitz & Stegun 7.1.26 polynomial erf, max abs error ~1.5e-7.
    # EUP divide replaced by approximate reciprocal (EUP-bound kernel relief).
    az = jnp.abs(z)
    t = pl.reciprocal(1.0 + 0.3275911 * az, approx=True)
    poly = t * (0.254829592 + t * (-0.284496736 + t * (1.421413741
              + t * (-1.453152027 + t * 1.061405429))))
    e = 1.0 - poly * jnp.exp(-az * az)
    return jnp.where(z < 0, -e, e)


def _gelu_exact(x):
    return 0.5 * x * (1.0 + _erf(x * 0.7071067811865476))


def _choose_row_tile(m, max_tile):
    """Largest valid row tile: full array, or a multiple-of-8 divisor <= max."""
    if m <= max_tile:
        return m
    start = max_tile - (max_tile % 8)
    for d in range(start, 7, -8):
        if m % d == 0:
            return d
    return m


def _choose_b_tile(B):
    """Batch rows per recurrence tile. Prefer 16-32 (latency hiding) while
    keeping >= 2 batch tiles when the batch allows (megacore on v7x)."""
    for bt in (32, 16):
        if B >= 2 * bt:
            return bt
    return 8 if B <= 8 else 16


def _ssm_chunk_cap(H, P, b_tile):
    """Max timesteps per SSM chunk derived from an explicit VMEM budget.
    Per-timestep bytes: in+out blocks (double-buffered) 4*bt*H*4 plus bu/ys
    scratch 2*bt*2P*4."""
    per_t = b_tile * (16 * H + 16 * P)
    cap = SSM_VMEM_BUDGET // max(per_t, 1)
    return int(max(8, min(512, cap)))


def _choose_chunk(L, cap):
    """Return (Lc, L_pad). Prefer an exact divisor in (cap/2, cap]; otherwise
    pad L up to a multiple of cap (ragged tail handled by masking/discard)."""
    if L <= cap:
        return L, L
    for d in range(cap, max(cap // 2, 1), -1):
        if L % d == 0:
            return d, L
    Lc = cap
    return Lc, -(-L // Lc) * Lc


# ---------------------------------------------------------------------------
# SSM kernel: fused BatchNorm + Bu projection + linear recurrence + C readout.
# Real and imaginary chains are fused along the lane axis (state = (bt, 2P)).
# ---------------------------------------------------------------------------
def make_ssm_kernel(Lc, b_tile, P, discretization):
    def kernel(u_ref, scale_ref, shift_ref, bcat_ref, ccat_ref,
               a_ref, s_ref, d_ref, out_ref,
               bu_ref, ys_ref, x1_ref, x2_ref):
        lc = pl.program_id(1)

        # reset the recurrence state at the start of each batch tile
        @pl.when(lc == 0)
        def _():
            x1_ref[...] = jnp.zeros_like(x1_ref)
            x2_ref[...] = jnp.zeros_like(x2_ref)

        # fused BatchNorm: u_n = (u - mean) / sqrt(var + eps) = u*scale + shift
        u_n = u_ref[0] * scale_ref[...] + shift_ref[...]      # (Lc*bt, H) f32
        u_nb = u_n.astype(bcat_ref.dtype)

        # Bu for real and imag chains in ONE matmul: columns [0:P]=real, [P:2P]=imag
        bu_ref[...] = jnp.dot(u_nb, bcat_ref[...],
                              preferred_element_type=jnp.float32)

        A = jnp.maximum(a_ref[...], 0.0)                      # relu(A_diag)   (1, P)
        step = _sigmoid(s_ref[...])                           # sigmoid(steps) (1, P)
        if discretization == "IM":
            # exact reciprocal: runs once per chunk on (1,P); error would
            # otherwise compound through the transition matrix over L steps.
            schur = 1.0 / (1.0 + step * step * A)
            m11 = 1.0 - step * step * A * schur
            m12 = -step * A * schur
            m21 = step * schur
            m22 = schur
            f1s = step * m11
            f2s = step * m21
        elif discretization == "IMEX":
            m11 = jnp.ones_like(A)
            m12 = -step * A
            m21 = step * jnp.ones_like(A)
            m22 = 1.0 - step * step * A
            f1s = step * jnp.ones_like(A)
            f2s = step * jnp.ones_like(A)
        else:
            raise NotImplementedError(discretization)

        # duplicate coefficients along lanes (real|imag share them) and hoist
        # the broadcast out of the (unrolled) recurrence loop.
        def dup(v):
            return jnp.broadcast_to(jnp.concatenate([v, v], axis=-1),
                                    (b_tile, 2 * P))
        m11, m12, m21, m22, f1s, f2s = map(dup, (m11, m12, m21, m22, f1s, f2s))

        # x_t = M x_{t-1} + F_t with x_{-1} = 0 (matches the associative-scan ref)
        def body(t, carry):
            x1, x2 = carry
            r0 = pl.multiple_of(t * b_tile, b_tile)
            bu = bu_ref[pl.ds(r0, b_tile), :]                  # (bt, 2P)
            nx1 = m11 * x1 + m12 * x2 + f1s * bu
            nx2 = m21 * x1 + m22 * x2 + f2s * bu
            ys_ref[pl.ds(r0, b_tile), :] = nx2
            return (nx1, nx2)

        unroll = 8 if Lc % 8 == 0 else (4 if Lc % 4 == 0 else 1)
        x1, x2 = lax.fori_loop(0, Lc, body, (x1_ref[...], x2_ref[...]),
                               unroll=unroll)
        x1_ref[...] = x1
        x2_ref[...] = x2

        # output = Re(ys @ C^T) + u_n * D, as ONE matmul against [C_r^T ; -C_i^T].
        # Recompute u_n (2 VPU ops on resident data) instead of keeping it live
        # across the recurrence loop.
        out = jnp.dot(ys_ref[...].astype(ccat_ref.dtype), ccat_ref[...],
                      preferred_element_type=jnp.float32)
        out_ref[0] = out + (u_ref[0] * scale_ref[...] + shift_ref[...]) * d_ref[...]

    return kernel


def linoss_ssm(x_tiled, L_pad, Lc, b_tile, scale, shift, p, discretization):
    """x_tiled: (nbt, L_pad*b_tile, H) time-major rows -> same-shaped SSM output."""
    nbt, _, H = x_tiled.shape
    P = p["A_diag"].shape[-1]
    nLc = L_pad // Lc
    kernel = make_ssm_kernel(Lc, b_tile, P, discretization)
    full2d = lambda bt, lc: (0, 0)
    return pl.pallas_call(
        kernel,
        out_shape=jax.ShapeDtypeStruct((nbt, L_pad * b_tile, H), jnp.float32),
        grid=(nbt, nLc),
        in_specs=[
            pl.BlockSpec((1, Lc * b_tile, H), lambda bt, lc: (bt, lc, 0)),
            pl.BlockSpec((1, H), full2d),            # BN scale
            pl.BlockSpec((1, H), full2d),            # BN shift
            pl.BlockSpec((H, 2 * P), full2d),        # [B_real^T | B_img^T]  bf16
            pl.BlockSpec((2 * P, H), full2d),        # [C_real^T ; -C_img^T] bf16
            pl.BlockSpec((1, P), full2d),            # A_diag
            pl.BlockSpec((1, P), full2d),            # steps
            pl.BlockSpec((1, H), full2d),            # D
        ],
        out_specs=pl.BlockSpec((1, Lc * b_tile, H), lambda bt, lc: (bt, lc, 0)),
        scratch_shapes=[
            pltpu.VMEM((Lc * b_tile, 2 * P), jnp.float32),   # bu (real|imag)
            pltpu.VMEM((Lc * b_tile, 2 * P), jnp.float32),   # ys (real|imag)
            pltpu.VMEM((b_tile, 2 * P), jnp.float32),        # x1 (carried state)
            pltpu.VMEM((b_tile, 2 * P), jnp.float32),        # x2 (carried state)
        ],
        compiler_params=pltpu.CompilerParams(
            dimension_semantics=("parallel", "arbitrary"),
            vmem_limit_bytes=VMEM_LIMIT_BYTES),
    )(x_tiled, scale, shift, p["B_cat"], p["C_cat"],
      p["A_diag"], p["steps"], p["D"])


# ---------------------------------------------------------------------------
# GLU + residual kernel (GELU fused into the prologue), row-tiled over (B*L).
# W1|W2 concatenated -> one matmul, lane-sliced into the two branches.
# ---------------------------------------------------------------------------
def glu_residual_kernel(g_ref, skip_ref, w_ref, b_ref, out_ref):
    H = out_ref.shape[-1]
    g = _gelu_exact(g_ref[...])                              # fused exact-erf GELU
    gb = g.astype(w_ref.dtype)
    ab = jnp.dot(gb, w_ref[...], preferred_element_type=jnp.float32) + b_ref[...]
    out_ref[...] = ab[:, :H] * _sigmoid(ab[:, H:]) + skip_ref[...]


def glu_residual(g, skip, w_cat, b_cat):
    R, H = g.shape
    TM = _choose_row_tile(R, TM_MAX)
    return pl.pallas_call(
        glu_residual_kernel,
        out_shape=jax.ShapeDtypeStruct((R, H), jnp.float32),
        grid=(R // TM,),
        in_specs=[
            pl.BlockSpec((TM, H), lambda i: (i, 0)),
            pl.BlockSpec((TM, H), lambda i: (i, 0)),
            pl.BlockSpec((H, 2 * H), lambda i: (0, 0)),      # [W1^T | W2^T] bf16
            pl.BlockSpec((1, 2 * H), lambda i: (0, 0)),      # [b1 | b2]
        ],
        out_specs=pl.BlockSpec((TM, H), lambda i: (i, 0)),
        compiler_params=pltpu.CompilerParams(
            dimension_semantics=("parallel",),
            vmem_limit_bytes=VMEM_LIMIT_BYTES),
    )(g, skip, w_cat, b_cat)


# ---------------------------------------------------------------------------
# Row-tiled linear projection (weights pre-transposed + pre-cast to bf16)
# ---------------------------------------------------------------------------
def linear_kernel(x_ref, wt_ref, b_ref, o_ref):
    xb = x_ref[...].astype(wt_ref.dtype)
    o_ref[...] = (jnp.dot(xb, wt_ref[...], preferred_element_type=jnp.float32)
                  + b_ref[...])


def linear_rows(x2d, wt, b):
    """x2d: (M, K) f32, wt: (K, N) bf16 (pre-transposed), b: (1, N) -> (M, N)."""
    M, K = x2d.shape
    N = wt.shape[1]
    TM = _choose_row_tile(M, TM_MAX)
    return pl.pallas_call(
        linear_kernel,
        out_shape=jax.ShapeDtypeStruct((M, N), jnp.float32),
        grid=(M // TM,),
        in_specs=[
            pl.BlockSpec((TM, K), lambda i: (i, 0)),
            pl.BlockSpec((K, N), lambda i: (0, 0)),
            pl.BlockSpec((1, N), lambda i: (0, 0)),
        ],
        out_specs=pl.BlockSpec((TM, N), lambda i: (i, 0)),
        compiler_params=pltpu.CompilerParams(
            dimension_semantics=("parallel",),
            vmem_limit_bytes=VMEM_LIMIT_BYTES),
    )(x2d, wt, b)


# ---------------------------------------------------------------------------
# One-time weight prep: transpose / bf16-cast / concatenate for kernel layouts
# ---------------------------------------------------------------------------
def prepare_params(params):
    prep = {
        "l1_wt": params["l1_w"].T.astype(MM_DTYPE),
        "l1_b": params["l1_b"].reshape(1, -1),
        "l2_wt": params["l2_w"].T.astype(MM_DTYPE),
        "l2_b": params["l2_b"].reshape(1, -1),
        "blocks": [],
    }
    for p in params["blocks"]:
        P = p["A_diag"].shape[0]
        H = p["D"].shape[0]
        prep["blocks"].append({
            "B_cat": jnp.concatenate([p["B_real"].T, p["B_img"].T],
                                     axis=1).astype(MM_DTYPE),          # (H, 2P)
            "C_cat": jnp.concatenate([p["C_real"].T, -p["C_img"].T],
                                     axis=0).astype(MM_DTYPE),          # (2P, H)
            "A_diag": p["A_diag"].reshape(1, P),
            "steps": p["steps"].reshape(1, P),
            "D": p["D"].reshape(1, H),
            "glu_w": jnp.concatenate([p["glu_w1"].T, p["glu_w2"].T],
                                     axis=1).astype(MM_DTYPE),          # (H, 2H)
            "glu_b": jnp.concatenate([p["glu_b1"], p["glu_b2"]]).reshape(1, 2 * H),
        })
    return prep


# ---------------------------------------------------------------------------
# Model forward (Pallas path)
# ---------------------------------------------------------------------------
def linoss_block_fwd(p, h_rows, nbt, L_pad, Lc, b_tile, H, bn_mask, n_real,
                     discretization):
    # BatchNorm1d(H, affine=False), training-mode batch stats (biased variance),
    # eps=1e-5.  Stats are a cross-batch reduction -> computed in plain JAX
    # (padded batch rows and padded timesteps masked out); the normalization
    # itself is fused into the SSM kernel via scale/shift.
    h4 = h_rows.reshape(nbt, L_pad, b_tile, H)
    s1 = jnp.sum(h4 * bn_mask, axis=(0, 1, 2))
    s2 = jnp.sum((h4 * h4) * bn_mask, axis=(0, 1, 2))
    mean = s1 / n_real
    var = s2 / n_real - mean * mean
    scale = (1.0 / jnp.sqrt(var + 1e-5)).reshape(1, H)
    shift = (-mean).reshape(1, H) * scale

    ssm_in = h_rows.reshape(nbt, L_pad * b_tile, H)
    ys = linoss_ssm(ssm_in, L_pad, Lc, b_tile, scale, shift, p, discretization)
    # TODO(synk): nn.Dropout is stochastic; treated as identity (eval semantics).
    # GELU is fused into the GLU kernel prologue.
    return glu_residual(ys.reshape(-1, H), h_rows, p["glu_w"], p["glu_b"])


def linoss_forward(params, x, *, classification, output_step, discretization):
    Bsz, L, N = x.shape
    H = params["l1_w"].shape[0]
    O = params["l2_w"].shape[0]
    P = params["blocks"][0]["A_diag"].shape[0]

    prep = prepare_params(params)

    # pad batch to a multiple of b_tile and switch to the tiled time-major row
    # layout: row index within a batch tile = t*b_tile + b  (sublane-full scan).
    b_tile = _choose_b_tile(Bsz)
    B_pad = -(-Bsz // b_tile) * b_tile
    nbt = B_pad // b_tile

    # chunk the sequence under an explicit VMEM budget; pad L if needed.
    Lc, L_pad = _choose_chunk(L, _ssm_chunk_cap(H, P, b_tile))

    xp = jnp.pad(x, ((0, B_pad - Bsz), (0, L_pad - L), (0, 0)))
    x_rows = (xp.reshape(nbt, b_tile, L_pad, N)
                .transpose(0, 2, 1, 3)
                .reshape(nbt * L_pad * b_tile, N))
    b_mask = (jnp.arange(B_pad) < Bsz).reshape(nbt, 1, b_tile, 1)
    t_mask = (jnp.arange(L_pad) < L).reshape(1, L_pad, 1, 1)
    bn_mask = (b_mask & t_mask).astype(jnp.float32)
    n_real = float(Bsz * L)

    h_rows = linear_rows(x_rows, prep["l1_wt"], prep["l1_b"])          # (R, H)
    for blk in prep["blocks"]:
        h_rows = linoss_block_fwd(blk, h_rows, nbt, L_pad, Lc, b_tile, H,
                                  bn_mask, n_real, discretization)

    h4 = h_rows.reshape(nbt, L_pad, b_tile, H)[:, :L]                  # drop time pad
    if classification:
        hm = jnp.mean(h4, axis=1)
        hm = hm.reshape(B_pad, H)[:Bsz]                                # (B, H)
        logits = linear_rows(hm, prep["l2_wt"], prep["l2_b"])          # (B, O)
        return jax.nn.softmax(logits, axis=-1)
    else:
        hs = h4[:, output_step - 1::output_step]                       # (nbt, Lo, bt, H)
        Lo = hs.shape[1]
        hs = hs.transpose(0, 2, 1, 3).reshape(B_pad, Lo, H)[:Bsz]
        out = linear_rows(hs.reshape(Bsz * Lo, H), prep["l2_wt"], prep["l2_b"])
        return jnp.tanh(out.reshape(Bsz, Lo, O))


# ---------------------------------------------------------------------------
# Pure-JAX reference (same math, no Pallas) for a sanity check
# ---------------------------------------------------------------------------
def _ref_ssm_single(u, p, discretization):
    A = jnp.maximum(p["A_diag"], 0.0)
    step = jax.nn.sigmoid(p["steps"])
    bu_r = u @ p["B_real"].T
    bu_i = u @ p["B_img"].T
    if discretization == "IM":
        schur = 1.0 / (1.0 + step ** 2 * A)
        m11 = 1.0 - step ** 2 * A * schur
        m12 = -step * A * schur
        m21 = step * schur
        m22 = schur
        f1s, f2s = step * m11, step * m21
    else:
        m11 = jnp.ones_like(A)
        m12 = -step * A
        m21 = step
        m22 = 1.0 - step ** 2 * A
        f1s = f2s = step

    def scan_fn(carry, bu):
        x1r, x2r, x1i, x2i = carry
        br, bi = bu
        nx1r = m11 * x1r + m12 * x2r + f1s * br
        nx2r = m21 * x1r + m22 * x2r + f2s * br
        nx1i = m11 * x1i + m12 * x2i + f1s * bi
        nx2i = m21 * x1i + m22 * x2i + f2s * bi
        return (nx1r, nx2r, nx1i, nx2i), (nx2r, nx2i)

    z = jnp.zeros_like(A)
    _, (ysr, ysi) = lax.scan(scan_fn, (z, z, z, z), (bu_r, bu_i))
    out = ysr @ p["C_real"].T - ysi @ p["C_img"].T
    return out + u * p["D"]


def ref_forward(params, x, *, classification, output_step, discretization):
    Bsz, L, N = x.shape
    h = x.reshape(Bsz * L, N) @ params["l1_w"].T + params["l1_b"]
    h = h.reshape(Bsz, L, -1)
    for p in params["blocks"]:
        skip = h
        mean = jnp.mean(h, axis=(0, 1), keepdims=True)
        var = jnp.var(h, axis=(0, 1), keepdims=True)
        xn = (h - mean) / jnp.sqrt(var + 1e-5)
        ys = jax.vmap(lambda u: _ref_ssm_single(u, p, discretization))(xn)
        g = jax.nn.gelu(ys, approximate=False)
        glu = (g @ p["glu_w1"].T + p["glu_b1"]) * jax.nn.sigmoid(g @ p["glu_w2"].T + p["glu_b2"])
        h = glu + skip
    if classification:
        h = h.mean(axis=1)
        h = h @ params["l2_w"].T + params["l2_b"]
        return jax.nn.softmax(h, axis=-1)
    else:
        h = h[:, output_step - 1::output_step, :]
        return jnp.tanh(h @ params["l2_w"].T + params["l2_b"])


# ---------------------------------------------------------------------------
# Deterministic parameter init (shapes match the torch module's __init__)
# ---------------------------------------------------------------------------
def init_params(key, num_block, N, ssm_size, H, O):
    def uni(k, shape, std):
        return jax.random.uniform(k, shape, jnp.float32, -std, std)

    def rand01(k, shape):
        return jax.random.uniform(k, shape, jnp.float32, 0.0, 1.0)

    keys = iter(jax.random.split(key, 8 + num_block * 12))
    params = {
        "l1_w": uni(next(keys), (H, N), 1.0 / math.sqrt(N)),
        "l1_b": uni(next(keys), (H,), 1.0 / math.sqrt(N)),
        "l2_w": uni(next(keys), (O, H), 1.0 / math.sqrt(H)),
        "l2_b": uni(next(keys), (O,), 1.0 / math.sqrt(H)),
        "blocks": [],
    }
    for _ in range(num_block):
        params["blocks"].append({
            "A_diag": rand01(next(keys), (ssm_size,)),
            "B_real": uni(next(keys), (ssm_size, H), 1.0 / math.sqrt(H)),
            "B_img": uni(next(keys), (ssm_size, H), 1.0 / math.sqrt(H)),
            "C_real": uni(next(keys), (H, ssm_size), 1.0 / math.sqrt(ssm_size)),
            "C_img": uni(next(keys), (H, ssm_size), 1.0 / math.sqrt(ssm_size)),
            "D": rand01(next(keys), (H,)),
            "steps": rand01(next(keys), (ssm_size,)),
            "glu_w1": uni(next(keys), (H, H), 1.0 / math.sqrt(H)),
            "glu_b1": uni(next(keys), (H,), 1.0 / math.sqrt(H)),
            "glu_w2": uni(next(keys), (H, H), 1.0 / math.sqrt(H)),
            "glu_b2": uni(next(keys), (H,), 1.0 / math.sqrt(H)),
        })
    return params


if __name__ == "__main__":
    num_block, N, ssm_size, H, O = 2, 8, 32, 32, 4
    B, L = 2, 16

    key = jax.random.PRNGKey(0)
    pkey, xkey = jax.random.split(key)
    params = init_params(pkey, num_block, N, ssm_size, H, O)
    x = jax.random.normal(xkey, (B, L, N), jnp.float32)

    # classification head, IM discretization
    out = linoss_forward(params, x, classification=True, output_step=1,
                         discretization="IM")
    out = jax.block_until_ready(out)
    ref = ref_forward(params, x, classification=True, output_step=1,
                      discretization="IM")
    assert out.shape == (B, O)
    assert jnp.allclose(out, ref, rtol=2e-2, atol=2e-2)

    # sequence head, IMEX discretization
    out2 = linoss_forward(params, x, classification=False, output_step=2,
                          discretization="IMEX")
    out2 = jax.block_until_ready(out2)
    ref2 = ref_forward(params, x, classification=False, output_step=2,
                       discretization="IMEX")
    assert out2.shape == ref2.shape
    assert jnp.allclose(out2, ref2, rtol=2e-2, atol=2e-2)

    print("KERNEL_OK")
</pallas_src>

<mosaic_0001>
module attributes {stable_mosaic.version = 11 : i64} {
  func.func @linear_kernel(%arg0: i32, %arg1: memref<128x8xf32, #tpu.memory_space<vmem>>, %arg2: memref<8x32xbf16, #tpu.memory_space<vmem>>, %arg3: memref<1x32xf32, #tpu.memory_space<vmem>>, %arg4: memref<128x32xf32, #tpu.memory_space<vmem>>) attributes {dimension_semantics = [#tpu.dimension_semantics<parallel>], iteration_bounds = array<i64: 1>, scalar_prefetch = 0 : i64, scratch_operands = 0 : i64, tpu.core_type = #tpu.core_type<tc>, window_params = [{transform_indices = @transform_0, window_bounds = array<i64: 128, 8>}, {pipeline_mode = #tpu.pipeline_mode<synchronous>, transform_indices = @transform_1, window_bounds = array<i64: 8, 32>}, {pipeline_mode = #tpu.pipeline_mode<synchronous>, transform_indices = @transform_2, window_bounds = array<i64: 1, 32>}, {transform_indices = @transform_3, window_bounds = array<i64: 128, 32>}]} {
    %c0 = arith.constant 0 : index
    %c0_0 = arith.constant 0 : index
    %0 = vector.load %arg1[%c0, %c0_0] : memref<128x8xf32, #tpu.memory_space<vmem>>, vector<128x8xf32>
    %1 = arith.truncf %0 : vector<128x8xf32> to vector<128x8xbf16>
    %c0_1 = arith.constant 0 : index
    %c0_2 = arith.constant 0 : index
    %2 = vector.load %arg2[%c0_1, %c0_2] : memref<8x32xbf16, #tpu.memory_space<vmem>>, vector<8x32xbf16>
    %cst = arith.constant dense<0.000000e+00> : vector<128x32xf32>
    %3 = tpu.matmul %1, %2, %cst {dimension_numbers = #tpu.dot_dimension_numbers<[1], [0], [0], [1], [0, 0, 1, 1], [], []>} : vector<128x8xbf16>, vector<8x32xbf16>, vector<128x32xf32> -> vector<128x32xf32>
    %c0_3 = arith.constant 0 : index
    %c0_4 = arith.constant 0 : index
    %4 = vector.load %arg3[%c0_3, %c0_4] : memref<1x32xf32, #tpu.memory_space<vmem>>, vector<1x32xf32>
    %5 = vector.broadcast %4 : vector<1x32xf32> to vector<128x32xf32>
    %6 = arith.addf %3, %5 : vector<128x32xf32>
    %c0_5 = arith.constant 0 : index
    %c0_6 = arith.constant 0 : index
    %7 = vector.load %arg4[%c0_5, %c0_6] : memref<128x32xf32, #tpu.memory_space<vmem>>, vector<128x32xf32>
    tpu.vector_store %arg4[%c0_5, %c0_6], %6 {strides = array<i32>} : memref<128x32xf32, #tpu.memory_space<vmem>>, vector<128x32xf32>,
    return
  }
  func.func @transform_0(%arg0: i32) -> (i32, i32) {
    %c0_i32 = arith.constant 0 : i32
    %c0_i32_0 = arith.constant 0 : i32
    return %arg0, %c0_i32 : i32, i32
  }
  func.func @transform_1(%arg0: i32) -> (i32, i32) {
    %c0_i32 = arith.constant 0 : i32
    %c0_i32_0 = arith.constant 0 : i32
    %c0_i32_1 = arith.constant 0 : i32
    return %c0_i32, %c0_i32_0 : i32, i32
  }
  func.func @transform_2(%arg0: i32) -> (i32, i32) {
    %c0_i32 = arith.constant 0 : i32
    %c0_i32_0 = arith.constant 0 : i32
    %c0_i32_1 = arith.constant 0 : i32
    return %c0_i32, %c0_i32_0 : i32, i32
  }
  func.func @transform_3(%arg0: i32) -> (i32, i32) {
    %c0_i32 = arith.constant 0 : i32
    %c0_i32_0 = arith.constant 0 : i32
    return %arg0, %c0_i32 : i32, i32
  }
}

</mosaic_0001>

<llo_original>
// kernel: tpu_custom_call.1
$region0: #{tpu_custom_call.1}
  #allocation0 [shape = 'u32[]', space=smem, size = 0x4, offset = 0x4, fixed_abs, tag = 'smem constant byte address 0x4 - core index']
  #allocation1 [shape = 'u32[144,128]{1,0:T(1,128)}', space=vmem, size = 0x12000, scoped, tag = 'internal scratch']
  %s0 = inlined_call_operand.vmem [shape: f32[128,8], index: 0, kind: input, shape index: {}]
  %s1 = inlined_call_operand.vmem [shape: bf16[8,32], index: 1, kind: input, shape index: {}]
  %s2 = inlined_call_operand.vmem [shape: f32[1,32], index: 2, kind: input, shape index: {}]
  %s3 = inlined_call_operand.vmem [shape: f32[128,32], index: 3, kind: output, shape index: {}]
  %s4 = sld [smem:[#allocation0]]
  $region22: #{tpu_custom_call.1} parent=0
    _
  %s6 = ssub.s32 1, %s4
  %s7 = scalar_select 0, %s6, %s4
  // Predicated region
  $region2: #{tpu_custom_call.1} parent=0 // pred_check
    _
  $region3: #{tpu_custom_call.1} parent=0 // pred_check_branch
    %9 = sbr.rel (0) target = $region5
  $region4: #{tpu_custom_call.1} parent=0 // pred_region
    _
  $region5: #{tpu_custom_call.1} parent=0 // pred_fallthru
    _
  // Predicated region
  $region6: #{tpu_custom_call.1} parent=0 // pred_check
    _
  $region7: #{tpu_custom_call.1} parent=0 // pred_check_branch
    %11 = sbr.rel (0) target = $region9
  $region8: #{tpu_custom_call.1} parent=0 // pred_region
    _
  $region9: #{tpu_custom_call.1} parent=0 // pred_fallthru
    _
  // Predicated region
  $region10: #{tpu_custom_call.1} parent=0 // pred_check
    _
  $region11: #{tpu_custom_call.1} parent=0 // pred_check_branch
    %13 = sbr.rel (0) target = $region13
  $region12: #{tpu_custom_call.1} parent=0 // pred_region
    _
  $region13: #{tpu_custom_call.1} parent=0 // pred_fallthru
    _
  %v15 = vld [vmem:[%s0] sm:$0xff]
  %v16 = vld [vmem:[%s0 + $0x8] sm:$0xff]
  %v17 = vld [vmem:[%s0 + $0x10] sm:$0xff]
  %v18 = vld [vmem:[%s0 + $0x18] sm:$0xff]
  %v19 = vld [vmem:[%s0 + $0x20] sm:$0xff]
  %v20 = vld [vmem:[%s0 + $0x28] sm:$0xff]
  %v21 = vld [vmem:[%s0 + $0x30] sm:$0xff]
  %v22 = vld [vmem:[%s0 + $0x38] sm:$0xff]
  %v23 = vld [vmem:[%s0 + $0x40] sm:$0xff]
  %v24 = vld [vmem:[%s0 + $0x48] sm:$0xff]
  %v25 = vld [vmem:[%s0 + $0x50] sm:$0xff]
  %v26 = vld [vmem:[%s0 + $0x58] sm:$0xff]
  %v27 = vld [vmem:[%s0 + $0x60] sm:$0xff]
  %v28 = vld [vmem:[%s0 + $0x68] sm:$0xff]
  %v29 = vld [vmem:[%s0 + $0x70] sm:$0xff]
  %v30 = vld [vmem:[%s0 + $0x78] sm:$0xff]
  %v31 = vpack.c.bf16 %v16, %v15
  %v32 = vpack.c.bf16 %v18, %v17
  %v33 = vpack.c.bf16 %v20, %v19
  %v34 = vpack.c.bf16 %v22, %v21
  %v35 = vpack.c.bf16 %v24, %v23
  %v36 = vpack.c.bf16 %v26, %v25
  %v37 = vpack.c.bf16 %v28, %v27
  %v38 = vpack.c.bf16 %v30, %v29
  %v39 = vld [vmem:[%s1] sm:$0xf]
  %v40 = vld [vmem:[%s2] sm:$0x1]
  %v42 = vlaneseq
  %v43 = vshrl.u32 %v42, 7
  %v44 = vsub.s32 0, %v43
  %v45 = vrot.slane %v40, %v44
  %vm47 = vcmask 64512
  %v49 = vsel %vm47, %v31, 0
  %v52 = vsel %vm47, %v32, 0
  %v55 = vsel %vm47, %v33, 0
  %v58 = vsel %vm47, %v34, 0
  %v61 = vsel %vm47, %v35, 0
  %v64 = vsel %vm47, %v36, 0
  %v67 = vsel %vm47, %v37, 0
  %v70 = vsel %vm47, %v38, 0
  %vm72 = vcmask 1043456
  %v74 = vsel %vm72, %v39, 0
  %76 = vmatprep.subr.bf16.mxu0 0
  %77 = vmatpush1.bf16.msra.mxu0 %v74
  %78 = vmatprep.subr.bf16.mxu0 0
  %79 = vmatpush1.bf16.msra.mxu0 0
  %80 = vmatprep.subr.bf16.mxu0 0
  %81 = vmatpush1.bf16.msra.mxu0 0
  %82 = vmatprep.subr.bf16.mxu0 0
  %83 = vmatpush1.bf16.msra.mxu0 0
  %84 = vmatprep.subr.bf16.mxu0 0
  %85 = vmatpush1.bf16.msra.mxu0 0
  %86 = vmatprep.subr.bf16.mxu0 0
  %87 = vmatpush1.bf16.msra.mxu0 0
  %88 = vmatprep.subr.bf16.mxu0 0
  %89 = vmatpush1.bf16.msra.mxu0 0
  %90 = vmatprep.subr.bf16.mxu0 0
  %91 = vmatpush1.bf16.msra.mxu0 0
  %92 = vmatprep.subr.bf16.mxu0 0
  %93 = vmatpush1.bf16.msra.mxu0 0
  %94 = vmatprep.subr.bf16.mxu0 0
  %95 = vmatpush1.bf16.msra.mxu0 0
  %96 = vmatprep.subr.bf16.mxu0 0
  %97 = vmatpush1.bf16.msra.mxu0 0
  %98 = vmatprep.subr.bf16.mxu0 0
  %99 = vmatpush1.bf16.msra.mxu0 0
  %100 = vmatprep.subr.bf16.mxu0 0
  %101 = vmatpush1.bf16.msra.mxu0 0
  %102 = vmatprep.subr.bf16.mxu0 0
  %103 = vmatpush1.bf16.msra.mxu0 0
  %104 = vmatprep.subr.bf16.mxu0 0
  %105 = vmatpush1.bf16.msra.mxu0 0
  %106 = vmatprep.subr.bf16.mxu0 0
  %107 = vmatpush1.bf16.msra.mxu0 0
  %108 = vmatprep.mubr.bf16.mxu0 0
  %109 = vmatmul.mubr.bf16.gmra.mrb[0].mxu0 %v49
  %v110 = vpop.f32.mrb[0].mxu0
  %v111 = vadd.f32 %v45, %v110
  %v112 = vpop.f32.mrb[0].mxu0
  %v113 = vpop.f32.mrb[0].mxu0
  %v114 = vadd.f32 %v45, %v113
  %v115 = vpop.f32.mrb[0].mxu0
  %116 = vmatprep.mubr.bf16.mxu0 0
  %117 = vmatmul.mubr.bf16.gmra.mrb[0].mxu0 %v52
  %v118 = vpop.f32.mrb[0].mxu0
  %v119 = vadd.f32 %v45, %v118
  %v120 = vpop.f32.mrb[0].mxu0
  %v121 = vpop.f32.mrb[0].mxu0
  %v122 = vadd.f32 %v45, %v121
  %v123 = vpop.f32.mrb[0].mxu0
  %124 = vmatprep.mubr.bf16.mxu0 0
  %125 = vmatmul.mubr.bf16.gmra.mrb[0].mxu0 %v55
  %v126 = vpop.f32.mrb[0].mxu0
  %v127 = vadd.f32 %v45, %v126
  %v128 = vpop.f32.mrb[0].mxu0
  %v129 = vpop.f32.mrb[0].mxu0
  %v130 = vadd.f32 %v45, %v129
  %v131 = vpop.f32.mrb[0].mxu0
  %132 = vmatprep.mubr.bf16.mxu0 0
  %133 = vmatmul.mubr.bf16.gmra.mrb[0].mxu0 %v58
  %v134 = vpop.f32.mrb[0].mxu0
  %v135 = vadd.f32 %v45, %v134
  %v136 = vpop.f32.mrb[0].mxu0
  %v137 = vpop.f32.mrb[0].mxu0
  %v138 = vadd.f32 %v45, %v137
  %v139 = vpop.f32.mrb[0].mxu0
  %140 = vmatprep.mubr.bf16.mxu0 0
  %141 = vmatmul.mubr.bf16.gmra.mrb[0].mxu0 %v61
  %v142 = vpop.f32.mrb[0].mxu0
  %v143 = vadd.f32 %v45, %v142
  %v144 = vpop.f32.mrb[0].mxu0
  %v145 = vpop.f32.mrb[0].mxu0
  %v146 = vadd.f32 %v45, %v145
  %v147 = vpop.f32.mrb[0].mxu0
  %148 = vmatprep.mubr.bf16.mxu0 0
  %149 = vmatmul.mubr.bf16.gmra.mrb[0].mxu0 %v64
  %v150 = vpop.f32.mrb[0].mxu0
  %v151 = vadd.f32 %v45, %v150
  %v152 = vpop.f32.mrb[0].mxu0
  %v153 = vpop.f32.mrb[0].mxu0
  %v154 = vadd.f32 %v45, %v153
  %v155 = vpop.f32.mrb[0].mxu0
  %156 = vmatprep.mubr.bf16.mxu0 0
  %157 = vmatmul.mubr.bf16.gmra.mrb[0].mxu0 %v67
  %v158 = vpop.f32.mrb[0].mxu0
  %v159 = vadd.f32 %v45, %v158
  %v160 = vpop.f32.mrb[0].mxu0
  %v161 = vpop.f32.mrb[0].mxu0
  %v162 = vadd.f32 %v45, %v161
  %v163 = vpop.f32.mrb[0].mxu0
  %164 = vmatprep.mubr.bf16.mxu0 0
  %165 = vmatmul.mubr.bf16.gmra.mrb[0].mxu0 %v70
  %v166 = vpop.f32.mrb[0].mxu0
  %v167 = vadd.f32 %v45, %v166
  %v168 = vpop.f32.mrb[0].mxu0
  %v169 = vpop.f32.mrb[0].mxu0
  %v170 = vadd.f32 %v45, %v169
  %v171 = vpop.f32.mrb[0].mxu0
  %172 = vdwg.mxu0
  %vm173 = vcmask 261120
  %174 = vst.msk [vmem:[%s3] sm:$0xff] %vm173, %v111
  %175 = vst.msk [vmem:[%s3 + $0x8] sm:$0xff] %vm173, %v114
  %176 = vst.msk [vmem:[%s3 + $0x10] sm:$0xff] %vm173, %v119
  %177 = vst.msk [vmem:[%s3 + $0x18] sm:$0xff] %vm173, %v122
  %178 = vst.msk [vmem:[%s3 + $0x20] sm:$0xff] %vm173, %v127
  %179 = vst.msk [vmem:[%s3 + $0x28] sm:$0xff] %vm173, %v130
  %180 = vst.msk [vmem:[%s3 + $0x30] sm:$0xff] %vm173, %v135
  %181 = vst.msk [vmem:[%s3 + $0x38] sm:$0xff] %vm173, %v138
  %182 = vst.msk [vmem:[%s3 + $0x40] sm:$0xff] %vm173, %v143
  %183 = vst.msk [vmem:[%s3 + $0x48] sm:$0xff] %vm173, %v146
  %184 = vst.msk [vmem:[%s3 + $0x50] sm:$0xff] %vm173, %v151
  %185 = vst.msk [vmem:[%s3 + $0x58] sm:$0xff] %vm173, %v154
  %186 = vst.msk [vmem:[%s3 + $0x60] sm:$0xff] %vm173, %v159
  %187 = vst.msk [vmem:[%s3 + $0x68] sm:$0xff] %vm173, %v162
  %188 = vst.msk [vmem:[%s3 + $0x70] sm:$0xff] %vm173, %v167
  %189 = vst.msk [vmem:[%s3 + $0x78] sm:$0xff] %vm173, %v170
  // Predicated region
  $region14: #{tpu_custom_call.1} parent=0 // pred_check
    _
  $region15: #{tpu_custom_call.1} parent=0 // pred_check_branch
    %191 = sbr.rel (0) target = $region17
  $region16: #{tpu_custom_call.1} parent=0 // pred_region
    _
  $region17: #{tpu_custom_call.1} parent=0 // pred_fallthru
    _
  // Predicated region
  $region18: #{tpu_custom_call.1} parent=0 // pred_check
    _
  $region19: #{tpu_custom_call.1} parent=0 // pred_check_branch
    %193 = sbr.rel (0) target = $region21
  $region20: #{tpu_custom_call.1} parent=0 // pred_region
    _
  $region21: #{tpu_custom_call.1} parent=0 // pred_fallthru
    _

</llo_original>
